<compile_context>
chip_gen: v5e
topology: v5e:2x2
jax: 0.10.0
libtpu: 0.0.40
codegen_flags: <defaults>
</compile_context>

<pallas_src>
import functools

import jax
import jax.numpy as jnp
from jax.experimental import pallas as pl
from jax.experimental.pallas import tpu as pltpu

IN_FEATURES = 800
OUT_FEATURES = 400


def linear_relu_add3_kernel(x_ref, w_ref, b_ref, o_ref):
    # x_ref: (tm, K) f32, w_ref: (K, N) bf16, b_ref: (1, N) f32, o_ref: (tm, N) f32
    x_bf = x_ref[...].astype(jnp.bfloat16)           # VPU cast, hides under DMA/MXU
    y = jnp.dot(x_bf, w_ref[...],                    # canonical (K-contraction) MXU dot
                preferred_element_type=jnp.float32)  # f32 accumulate
    y = y + b_ref[...]                                # bias
    y = jnp.maximum(y, 0.0)                           # relu
    o_ref[...] = y + 3.0                              # v8 = v7 + 3


def prepare_params(w, b):
    """One-time parameter prep, hoisted out of the per-call hot path.

    w: PyTorch-layout (out_features, in_features) f32  ->  (K, N) bf16
    b: (out_features,) f32                             ->  (1, N) f32
    """
    wt_bf = jnp.asarray(w, jnp.float32).T.astype(jnp.bfloat16)   # (800, 400) bf16
    b2d = jnp.asarray(b, jnp.float32).reshape(1, OUT_FEATURES)    # (1, 400) f32
    return wt_bf, b2d


def _round_up(v, m):
    return ((v + m - 1) // m) * m


def _pick_tm(M, tm_max):
    """Pick the M tile. Single full-dim tile when it fits; otherwise a multiple
    of 8 chosen so the number of tiles is even (splits cleanly across the two
    TensorCores on v7x)."""
    if M <= tm_max:
        return M                                   # block == full array dim -> legal
    n = pl.cdiv(M, tm_max)
    if n > 1 and n % 2 == 1:
        n += 1                                     # even tile count for megacore
    return min(tm_max, _round_up(pl.cdiv(M, n), 8))


@functools.partial(jax.jit, static_argnames=("tm_max",))
def model_forward(x, wt_bf, b2d, *, tm_max=512):
    """x: (M, 800) f32, wt_bf: (800, 400) bf16, b2d: (1, 400) f32 -> (M, 400) f32."""
    M = x.shape[0]
    tm = _pick_tm(M, tm_max)
    grid_m = pl.cdiv(M, tm)

    return pl.pallas_call(
        linear_relu_add3_kernel,
        out_shape=jax.ShapeDtypeStruct((M, OUT_FEATURES), jnp.float32),
        grid_spec=pl.GridSpec(
            grid=(grid_m,),
            in_specs=[
                pl.BlockSpec((tm, IN_FEATURES), lambda i: (i, 0)),
                # constant index_map: DMA'd once, stays VMEM-resident across steps
                pl.BlockSpec((IN_FEATURES, OUT_FEATURES), lambda i: (0, 0)),
                pl.BlockSpec((1, OUT_FEATURES), lambda i: (0, 0)),
            ],
            out_specs=pl.BlockSpec((tm, OUT_FEATURES), lambda i: (i, 0)),
        ),
        compiler_params=pltpu.CompilerParams(
            # M tiles are independent -> sharded across TCs on v7x megacore.
            dimension_semantics=("parallel",)),
    )(x, wt_bf, b2d)


def _reference(x, w, b):
    # Reference with the same bf16 quantization of x and w as the kernel
    # (products exact in f32), highest-precision f32 contraction. Note: this is
    # ~1e-2 from a true fp32 torch Linear; the bf16 streaming is intentional.
    xr = x.astype(jnp.bfloat16).astype(jnp.float32)
    wr = w.astype(jnp.bfloat16).astype(jnp.float32)
    y = jax.lax.dot_general(
        xr, wr, dimension_numbers=(((1,), (1,)), ((), ())),
        precision=jax.lax.Precision.HIGHEST)
    return jnp.maximum(y + b, 0.0) + 3.0


if __name__ == "__main__":
    key = jax.random.PRNGKey(0)
    kx, kw, kb, kx2 = jax.random.split(key, 4)

    # Deterministic parameter init (Linear(800, 400) shapes, PyTorch layout).
    bound = 1.0 / (IN_FEATURES ** 0.5)
    w = jax.random.uniform(kw, (OUT_FEATURES, IN_FEATURES),
                           dtype=jnp.float32, minval=-bound, maxval=bound)
    b = jax.random.uniform(kb, (OUT_FEATURES,),
                           dtype=jnp.float32, minval=-bound, maxval=bound)

    # One-time prep (transpose + bf16 cast) hoisted out of the forward pass.
    wt_bf, b2d = prepare_params(w, b)

    # Input consistent with the module: x2 = torch.randn(1, 800)
    x = jax.random.normal(kx, (1, IN_FEATURES), dtype=jnp.float32)
    out = model_forward(x, wt_bf, b2d)
    jax.block_until_ready(out)
    ref = _reference(x, w, b)
    assert out.shape == (1, OUT_FEATURES)
    assert jnp.allclose(out, ref, atol=1e-3, rtol=1e-3), "mismatch vs reference (M=1)"

    # Also exercise the multi-step grid path (even tile count, resident weight).
    xb = jax.random.normal(kx2, (96, IN_FEATURES), dtype=jnp.float32)
    out_b = model_forward(xb, wt_bf, b2d, tm_max=32)   # -> tm=24, grid_m=4
    jax.block_until_ready(out_b)
    ref_b = _reference(xb, w, b)
    assert jnp.allclose(out_b, ref_b, atol=1e-3, rtol=1e-3), "mismatch vs reference (M=96)"

    print("KERNEL_OK")
</pallas_src>

<mosaic_0001>
module attributes {stable_mosaic.version = 11 : i64} {
  func.func @linear_relu_add3_kernel(%arg0: i32, %arg1: memref<1x800xf32, #tpu.memory_space<vmem>>, %arg2: memref<800x400xbf16, #tpu.memory_space<vmem>>, %arg3: memref<1x400xf32, #tpu.memory_space<vmem>>, %arg4: memref<1x400xf32, #tpu.memory_space<vmem>>) attributes {dimension_semantics = [#tpu.dimension_semantics<parallel>], iteration_bounds = array<i64: 1>, scalar_prefetch = 0 : i64, scratch_operands = 0 : i64, tpu.core_type = #tpu.core_type<tc>, window_params = [{transform_indices = @transform_0, window_bounds = array<i64: 1, 800>}, {pipeline_mode = #tpu.pipeline_mode<synchronous>, transform_indices = @transform_1, window_bounds = array<i64: 800, 400>}, {pipeline_mode = #tpu.pipeline_mode<synchronous>, transform_indices = @transform_2, window_bounds = array<i64: 1, 400>}, {transform_indices = @transform_3, window_bounds = array<i64: 1, 400>}]} {
    %c0 = arith.constant 0 : index
    %c0_0 = arith.constant 0 : index
    %0 = vector.load %arg1[%c0, %c0_0] : memref<1x800xf32, #tpu.memory_space<vmem>>, vector<1x800xf32>
    %1 = arith.truncf %0 : vector<1x800xf32> to vector<1x800xbf16>
    %c0_1 = arith.constant 0 : index
    %c0_2 = arith.constant 0 : index
    %2 = vector.load %arg2[%c0_1, %c0_2] : memref<800x400xbf16, #tpu.memory_space<vmem>>, vector<800x400xbf16>
    %cst = arith.constant dense<0.000000e+00> : vector<1x400xf32>
    %3 = tpu.matmul %1, %2, %cst {dimension_numbers = #tpu.dot_dimension_numbers<[1], [0], [0], [1], [0, 0, 1, 1], [], []>} : vector<1x800xbf16>, vector<800x400xbf16>, vector<1x400xf32> -> vector<1x400xf32>
    %c0_3 = arith.constant 0 : index
    %c0_4 = arith.constant 0 : index
    %4 = vector.load %arg3[%c0_3, %c0_4] : memref<1x400xf32, #tpu.memory_space<vmem>>, vector<1x400xf32>
    %5 = arith.addf %3, %4 : vector<1x400xf32>
    %cst_5 = arith.constant 0.000000e+00 : f32
    %6 = vector.broadcast %cst_5 : f32 to vector<1x400xf32>
    %7 = arith.maximumf %5, %6 : vector<1x400xf32>
    %cst_6 = arith.constant 3.000000e+00 : f32
    %8 = vector.broadcast %cst_6 : f32 to vector<1x400xf32>
    %9 = arith.addf %7, %8 : vector<1x400xf32>
    %c0_7 = arith.constant 0 : index
    %c0_8 = arith.constant 0 : index
    %10 = vector.load %arg4[%c0_7, %c0_8] : memref<1x400xf32, #tpu.memory_space<vmem>>, vector<1x400xf32>
    tpu.vector_store %arg4[%c0_7, %c0_8], %9 {strides = array<i32>} : memref<1x400xf32, #tpu.memory_space<vmem>>, vector<1x400xf32>,
    return
  }
  func.func @transform_0(%arg0: i32) -> (i32, i32) {
    %c0_i32 = arith.constant 0 : i32
    %c0_i32_0 = arith.constant 0 : i32
    return %arg0, %c0_i32 : i32, i32
  }
  func.func @transform_1(%arg0: i32) -> (i32, i32) {
    %c0_i32 = arith.constant 0 : i32
    %c0_i32_0 = arith.constant 0 : i32
    %c0_i32_1 = arith.constant 0 : i32
    return %c0_i32, %c0_i32_0 : i32, i32
  }
  func.func @transform_2(%arg0: i32) -> (i32, i32) {
    %c0_i32 = arith.constant 0 : i32
    %c0_i32_0 = arith.constant 0 : i32
    %c0_i32_1 = arith.constant 0 : i32
    return %c0_i32, %c0_i32_0 : i32, i32
  }
  func.func @transform_3(%arg0: i32) -> (i32, i32) {
    %c0_i32 = arith.constant 0 : i32
    %c0_i32_0 = arith.constant 0 : i32
    return %arg0, %c0_i32 : i32, i32
  }
}

</mosaic_0001>

<llo_original>
// kernel: model_forward.1
$region0: #{model_forward.1}
  #allocation0 [shape = 'u32[]', space=smem, size = 0x4, offset = 0x4, fixed_abs, tag = 'smem constant byte address 0x4 - core index']
  #allocation1 [shape = 'u32[72,128]{1,0:T(1,128)}', space=vmem, size = 0x9000, scoped, tag = 'internal scratch']
  %s0 = inlined_call_operand.vmem [shape: f32[1,800], index: 0, kind: input, shape index: {}]
  %s1 = inlined_call_operand.vmem [shape: bf16[800,400], index: 1, kind: input, shape index: {}]
  %s2 = inlined_call_operand.vmem [shape: f32[1,400], index: 2, kind: input, shape index: {}]
  %s3 = inlined_call_operand.hbm [shape: f32[1,400], index: 3, kind: output, shape index: {}]
  %s4 = sld [smem:[#allocation0]]
  $region22: #{model_forward.1} parent=0
    _
  %s6 = ssub.s32 1, %s4
  %s7 = scalar_select 0, %s6, %s4
  $region1: #{model_forward.1} parent=0
    #allocation2 [shape = 'u8[2048]{0}', space=vmem, size = 0x800, scoped, tag = 'output window, operand 0, single buffered']
    #allocation3 [shape = 's32[1]{0}', space=sflag, size = 0x4, scoped, tag = 'scoped memory for model_forward.1']
    %8 = vsyncpa [#allocation3], 0
    // Predicated region
    $region2: #{model_forward.1} parent=1 // pred_check
      _
    $region3: #{model_forward.1} parent=1 // pred_check_branch
      %10 = sbr.rel (0) target = $region5
    $region4: #{model_forward.1} parent=1 // pred_region
      _
    $region5: #{model_forward.1} parent=1 // pred_fallthru
      _
    // Predicated region
    $region6: #{model_forward.1} parent=1 // pred_check
      _
    $region7: #{model_forward.1} parent=1 // pred_check_branch
      %12 = sbr.rel (0) target = $region9
    $region8: #{model_forward.1} parent=1 // pred_region
      _
    $region9: #{model_forward.1} parent=1 // pred_fallthru
      _
    // Predicated region
    $region10: #{model_forward.1} parent=1 // pred_check
      _
    $region11: #{model_forward.1} parent=1 // pred_check_branch
      %14 = sbr.rel (0) target = $region13
    $region12: #{model_forward.1} parent=1 // pred_region
      _
    $region13: #{model_forward.1} parent=1 // pred_fallthru
      _
    %v16 = vld [vmem:[%s0] sm:$0x7f]
    %v18 = vperm.slane %v16, 0
    %v19 = vperm.slane %v16, 1
    %v20 = vperm.slane %v16, 2
    %v21 = vperm.slane %v16, 3
    %v22 = vperm.slane %v16, 4
    %v23 = vperm.slane %v16, 5
    %v24 = vperm.slane %v16, 6
    %v32 = vpack.c.bf16 %v18, %v18
    %v33 = vpack.c.bf16 %v19, %v19
    %v34 = vpack.c.bf16 %v20, %v20
    %v35 = vpack.c.bf16 %v21, %v21
    %v36 = vpack.c.bf16 %v22, %v22
    %v37 = vpack.c.bf16 %v23, %v23
    %v38 = vpack.c.bf16 %v24, %v24
    %v39 = vld [vmem:[%s1] sm:$0xff]
    %v40 = vld [vmem:[%s1 + $0x8] sm:$0xff]
    %v41 = vld [vmem:[%s1 + $0x10] sm:$0xff]
    %v42 = vld [vmem:[%s1 + $0x18] sm:$0xff]
    %v43 = vld [vmem:[%s1 + $0x20] sm:$0xff]
    %v44 = vld [vmem:[%s1 + $0x28] sm:$0xff]
    %v45 = vld [vmem:[%s1 + $0x30] sm:$0xff]
    %v46 = vld [vmem:[%s1 + $0x38] sm:$0xff]
    %v47 = vld [vmem:[%s1 + $0x40] sm:$0xff]
    %v48 = vld [vmem:[%s1 + $0x48] sm:$0xff]
    %v49 = vld [vmem:[%s1 + $0x50] sm:$0xff]
    %v50 = vld [vmem:[%s1 + $0x58] sm:$0xff]
    %v51 = vld [vmem:[%s1 + $0x60] sm:$0xff]
    %v52 = vld [vmem:[%s1 + $0x68] sm:$0xff]
    %v53 = vld [vmem:[%s1 + $0x70] sm:$0xff]
    %v54 = vld [vmem:[%s1 + $0x78] sm:$0xff]
    %v55 = vld [vmem:[%s1 + $0x80] sm:$0xff]
    %v56 = vld [vmem:[%s1 + $0x88] sm:$0xff]
    %v57 = vld [vmem:[%s1 + $0x90] sm:$0xff]
    %v58 = vld [vmem:[%s1 + $0x98] sm:$0xff]
    %v59 = vld [vmem:[%s1 + $0xa0] sm:$0xff]
    %v60 = vld [vmem:[%s1 + $0xa8] sm:$0xff]
    %v61 = vld [vmem:[%s1 + $0xb0] sm:$0xff]
    %v62 = vld [vmem:[%s1 + $0xb8] sm:$0xff]
    %v63 = vld [vmem:[%s1 + $0xc0] sm:$0xff]
    %v64 = vld [vmem:[%s1 + $0xc8] sm:$0xff]
    %v65 = vld [vmem:[%s1 + $0xd0] sm:$0xff]
    %v66 = vld [vmem:[%s1 + $0xd8] sm:$0xff]
    %v67 = vld [vmem:[%s1 + $0xe0] sm:$0xff]
    %v68 = vld [vmem:[%s1 + $0xe8] sm:$0xff]
    %v69 = vld [vmem:[%s1 + $0xf0] sm:$0xff]
    %v70 = vld [vmem:[%s1 + $0xf8] sm:$0xff]
    %v71 = vld [vmem:[%s1 + $0x100] sm:$0xff]
    %v72 = vld [vmem:[%s1 + $0x108] sm:$0xff]
    %v73 = vld [vmem:[%s1 + $0x110] sm:$0xff]
    %v74 = vld [vmem:[%s1 + $0x118] sm:$0xff]
    %v75 = vld [vmem:[%s1 + $0x120] sm:$0xff]
    %v76 = vld [vmem:[%s1 + $0x128] sm:$0xff]
    %v77 = vld [vmem:[%s1 + $0x130] sm:$0xff]
    %v78 = vld [vmem:[%s1 + $0x138] sm:$0xff]
    %v79 = vld [vmem:[%s1 + $0x140] sm:$0xff]
    %v80 = vld [vmem:[%s1 + $0x148] sm:$0xff]
    %v81 = vld [vmem:[%s1 + $0x150] sm:$0xff]
    %v82 = vld [vmem:[%s1 + $0x158] sm:$0xff]
    %v83 = vld [vmem:[%s1 + $0x160] sm:$0xff]
    %v84 = vld [vmem:[%s1 + $0x168] sm:$0xff]
    %v85 = vld [vmem:[%s1 + $0x170] sm:$0xff]
    %v86 = vld [vmem:[%s1 + $0x178] sm:$0xff]
    %v87 = vld [vmem:[%s1 + $0x180] sm:$0xff]
    %v88 = vld [vmem:[%s1 + $0x188] sm:$0xff]
    %v89 = vld [vmem:[%s1 + $0x190] sm:$0xff]
    %v90 = vld [vmem:[%s1 + $0x198] sm:$0xff]
    %v91 = vld [vmem:[%s1 + $0x1a0] sm:$0xff]
    %v92 = vld [vmem:[%s1 + $0x1a8] sm:$0xff]
    %v93 = vld [vmem:[%s1 + $0x1b0] sm:$0xff]
    %v94 = vld [vmem:[%s1 + $0x1b8] sm:$0xff]
    %v95 = vld [vmem:[%s1 + $0x1c0] sm:$0xff]
    %v96 = vld [vmem:[%s1 + $0x1c8] sm:$0xff]
    %v97 = vld [vmem:[%s1 + $0x1d0] sm:$0xff]
    %v98 = vld [vmem:[%s1 + $0x1d8] sm:$0xff]
    %v99 = vld [vmem:[%s1 + $0x1e0] sm:$0xff]
    %v100 = vld [vmem:[%s1 + $0x1e8] sm:$0xff]
    %v101 = vld [vmem:[%s1 + $0x1f0] sm:$0xff]
    %v102 = vld [vmem:[%s1 + $0x1f8] sm:$0xff]
    %v103 = vld [vmem:[%s1 + $0x200] sm:$0xff]
    %v104 = vld [vmem:[%s1 + $0x208] sm:$0xff]
    %v105 = vld [vmem:[%s1 + $0x210] sm:$0xff]
    %v106 = vld [vmem:[%s1 + $0x218] sm:$0xff]
    %v107 = vld [vmem:[%s1 + $0x220] sm:$0xff]
    %v108 = vld [vmem:[%s1 + $0x228] sm:$0xff]
    %v109 = vld [vmem:[%s1 + $0x230] sm:$0xff]
    %v110 = vld [vmem:[%s1 + $0x238] sm:$0xff]
    %v111 = vld [vmem:[%s1 + $0x240] sm:$0xff]
    %v112 = vld [vmem:[%s1 + $0x248] sm:$0xff]
    %v113 = vld [vmem:[%s1 + $0x250] sm:$0xff]
    %v114 = vld [vmem:[%s1 + $0x258] sm:$0xff]
    %v115 = vld [vmem:[%s1 + $0x260] sm:$0xff]
    %v116 = vld [vmem:[%s1 + $0x268] sm:$0xff]
    %v117 = vld [vmem:[%s1 + $0x270] sm:$0xff]
    %v118 = vld [vmem:[%s1 + $0x278] sm:$0xff]
    %v119 = vld [vmem:[%s1 + $0x280] sm:$0xff]
    %v120 = vld [vmem:[%s1 + $0x288] sm:$0xff]
    %v121 = vld [vmem:[%s1 + $0x290] sm:$0xff]
    %v122 = vld [vmem:[%s1 + $0x298] sm:$0xff]
    %v123 = vld [vmem:[%s1 + $0x2a0] sm:$0xff]
    %v124 = vld [vmem:[%s1 + $0x2a8] sm:$0xff]
    %v125 = vld [vmem:[%s1 + $0x2b0] sm:$0xff]
    %v126 = vld [vmem:[%s1 + $0x2b8] sm:$0xff]
    %v127 = vld [vmem:[%s1 + $0x2c0] sm:$0xff]
    %v128 = vld [vmem:[%s1 + $0x2c8] sm:$0xff]
    %v129 = vld [vmem:[%s1 + $0x2d0] sm:$0xff]
    %v130 = vld [vmem:[%s1 + $0x2d8] sm:$0xff]
    %v131 = vld [vmem:[%s1 + $0x2e0] sm:$0xff]
    %v132 = vld [vmem:[%s1 + $0x2e8] sm:$0xff]
    %v133 = vld [vmem:[%s1 + $0x2f0] sm:$0xff]
    %v134 = vld [vmem:[%s1 + $0x2f8] sm:$0xff]
    %v135 = vld [vmem:[%s1 + $0x300] sm:$0xff]
    %v136 = vld [vmem:[%s1 + $0x308] sm:$0xff]
    %v137 = vld [vmem:[%s1 + $0x310] sm:$0xff]
    %v138 = vld [vmem:[%s1 + $0x318] sm:$0xff]
    %v139 = vld [vmem:[%s1 + $0x320] sm:$0xff]
    %v140 = vld [vmem:[%s1 + $0x328] sm:$0xff]
    %v141 = vld [vmem:[%s1 + $0x330] sm:$0xff]
    %v142 = vld [vmem:[%s1 + $0x338] sm:$0xff]
    %v143 = vld [vmem:[%s1 + $0x340] sm:$0xff]
    %v144 = vld [vmem:[%s1 + $0x348] sm:$0xff]
    %v145 = vld [vmem:[%s1 + $0x350] sm:$0xff]
    %v146 = vld [vmem:[%s1 + $0x358] sm:$0xff]
    %v147 = vld [vmem:[%s1 + $0x360] sm:$0xff]
    %v148 = vld [vmem:[%s1 + $0x368] sm:$0xff]
    %v149 = vld [vmem:[%s1 + $0x370] sm:$0xff]
    %v150 = vld [vmem:[%s1 + $0x378] sm:$0xff]
    %v151 = vld [vmem:[%s1 + $0x380] sm:$0xff]
    %v152 = vld [vmem:[%s1 + $0x388] sm:$0xff]
    %v153 = vld [vmem:[%s1 + $0x390] sm:$0xff]
    %v154 = vld [vmem:[%s1 + $0x398] sm:$0xff]
    %v155 = vld [vmem:[%s1 + $0x3a0] sm:$0xff]
    %v156 = vld [vmem:[%s1 + $0x3a8] sm:$0xff]
    %v157 = vld [vmem:[%s1 + $0x3b0] sm:$0xff]
    %v158 = vld [vmem:[%s1 + $0x3b8] sm:$0xff]
    %v159 = vld [vmem:[%s1 + $0x3c0] sm:$0xff]
    %v160 = vld [vmem:[%s1 + $0x3c8] sm:$0xff]
    %v161 = vld [vmem:[%s1 + $0x3d0] sm:$0xff]
    %v162 = vld [vmem:[%s1 + $0x3d8] sm:$0xff]
    %v163 = vld [vmem:[%s1 + $0x3e0] sm:$0xff]
    %v164 = vld [vmem:[%s1 + $0x3e8] sm:$0xff]
    %v165 = vld [vmem:[%s1 + $0x3f0] sm:$0xff]
    %v166 = vld [vmem:[%s1 + $0x3f8] sm:$0xff]
    %v167 = vld [vmem:[%s1 + $0x400] sm:$0xff]
    %v168 = vld [vmem:[%s1 + $0x408] sm:$0xff]
    %v169 = vld [vmem:[%s1 + $0x410] sm:$0xff]
    %v170 = vld [vmem:[%s1 + $0x418] sm:$0xff]
    %v171 = vld [vmem:[%s1 + $0x420] sm:$0xff]
    %v172 = vld [vmem:[%s1 + $0x428] sm:$0xff]
    %v173 = vld [vmem:[%s1 + $0x430] sm:$0xff]
    %v174 = vld [vmem:[%s1 + $0x438] sm:$0xff]
    %v175 = vld [vmem:[%s1 + $0x440] sm:$0xff]
    %v176 = vld [vmem:[%s1 + $0x448] sm:$0xff]
    %v177 = vld [vmem:[%s1 + $0x450] sm:$0xff]
    %v178 = vld [vmem:[%s1 + $0x458] sm:$0xff]
    %v179 = vld [vmem:[%s1 + $0x460] sm:$0xff]
    %v180 = vld [vmem:[%s1 + $0x468] sm:$0xff]
    %v181 = vld [vmem:[%s1 + $0x470] sm:$0xff]
    %v182 = vld [vmem:[%s1 + $0x478] sm:$0xff]
    %v183 = vld [vmem:[%s1 + $0x480] sm:$0xff]
    %v184 = vld [vmem:[%s1 + $0x488] sm:$0xff]
    %v185 = vld [vmem:[%s1 + $0x490] sm:$0xff]
    %v186 = vld [vmem:[%s1 + $0x498] sm:$0xff]
    %v187 = vld [vmem:[%s1 + $0x4a0] sm:$0xff]
    %v188 = vld [vmem:[%s1 + $0x4a8] sm:$0xff]
    %v189 = vld [vmem:[%s1 + $0x4b0] sm:$0xff]
    %v190 = vld [vmem:[%s1 + $0x4b8] sm:$0xff]
    %v191 = vld [vmem:[%s1 + $0x4c0] sm:$0xff]
    %v192 = vld [vmem:[%s1 + $0x4c8] sm:$0xff]
    %v193 = vld [vmem:[%s1 + $0x4d0] sm:$0xff]
    %v194 = vld [vmem:[%s1 + $0x4d8] sm:$0xff]
    %v195 = vld [vmem:[%s1 + $0x4e0] sm:$0xff]
    %v196 = vld [vmem:[%s1 + $0x4e8] sm:$0xff]
    %v197 = vld [vmem:[%s1 + $0x4f0] sm:$0xff]
    %v198 = vld [vmem:[%s1 + $0x4f8] sm:$0xff]
    %v199 = vld [vmem:[%s1 + $0x500] sm:$0xff]
    %v200 = vld [vmem:[%s1 + $0x508] sm:$0xff]
    %v201 = vld [vmem:[%s1 + $0x510] sm:$0xff]
    %v202 = vld [vmem:[%s1 + $0x518] sm:$0xff]
    %v203 = vld [vmem:[%s1 + $0x520] sm:$0xff]
    %v204 = vld [vmem:[%s1 + $0x528] sm:$0xff]
    %v205 = vld [vmem:[%s1 + $0x530] sm:$0xff]
    %v206 = vld [vmem:[%s1 + $0x538] sm:$0xff]
    %v207 = vld [vmem:[%s1 + $0x540] sm:$0xff]
    %v208 = vld [vmem:[%s1 + $0x548] sm:$0xff]
    %v209 = vld [vmem:[%s1 + $0x550] sm:$0xff]
    %v210 = vld [vmem:[%s1 + $0x558] sm:$0xff]
    %v211 = vld [vmem:[%s1 + $0x560] sm:$0xff]
    %v212 = vld [vmem:[%s1 + $0x568] sm:$0xff]
    %v213 = vld [vmem:[%s1 + $0x570] sm:$0xff]
    %v214 = vld [vmem:[%s1 + $0x578] sm:$0xff]
    %v215 = vld [vmem:[%s1 + $0x580] sm:$0xff]
    %v216 = vld [vmem:[%s1 + $0x588] sm:$0xff]
    %v217 = vld [vmem:[%s1 + $0x590] sm:$0xff]
    %v218 = vld [vmem:[%s1 + $0x598] sm:$0xff]
    %v219 = vld [vmem:[%s1 + $0x5a0] sm:$0xff]
    %v220 = vld [vmem:[%s1 + $0x5a8] sm:$0xff]
    %v221 = vld [vmem:[%s1 + $0x5b0] sm:$0xff]
    %v222 = vld [vmem:[%s1 + $0x5b8] sm:$0xff]
    %v223 = vld [vmem:[%s1 + $0x5c0] sm:$0xff]
    %v224 = vld [vmem:[%s1 + $0x5c8] sm:$0xff]
    %v225 = vld [vmem:[%s1 + $0x5d0] sm:$0xff]
    %v226 = vld [vmem:[%s1 + $0x5d8] sm:$0xff]
    %v227 = vld [vmem:[%s1 + $0x5e0] sm:$0xff]
    %v228 = vld [vmem:[%s1 + $0x5e8] sm:$0xff]
    %v229 = vld [vmem:[%s1 + $0x5f0] sm:$0xff]
    %v230 = vld [vmem:[%s1 + $0x5f8] sm:$0xff]
    %v231 = vld [vmem:[%s1 + $0x600] sm:$0xff]
    %v232 = vld [vmem:[%s1 + $0x608] sm:$0xff]
    %v233 = vld [vmem:[%s1 + $0x610] sm:$0xff]
    %v234 = vld [vmem:[%s1 + $0x618] sm:$0xff]
    %v235 = vld [vmem:[%s1 + $0x620] sm:$0xff]
    %v236 = vld [vmem:[%s1 + $0x628] sm:$0xff]
    %v237 = vld [vmem:[%s1 + $0x630] sm:$0xff]
    %v238 = vld [vmem:[%s1 + $0x638] sm:$0xff]
    %v239 = vld [vmem:[%s2] sm:$0xf]
    %v440 = vunpack.c.l.b16 %v39
    %v441 = vunpack.c.h.b16 %v39
    %v442 = vunpack.c.l.b16 %v40
    %v443 = vunpack.c.h.b16 %v40
    %v444 = vunpack.c.l.b16 %v41
    %v445 = vunpack.c.h.b16 %v41
    %v446 = vunpack.c.l.b16 %v42
    %v447 = vunpack.c.h.b16 %v42
    %v448 = vunpack.c.l.b16 %v43
    %v449 = vunpack.c.h.b16 %v43
    %v450 = vunpack.c.l.b16 %v44
    %v451 = vunpack.c.h.b16 %v44
    %v452 = vunpack.c.l.b16 %v45
    %v453 = vunpack.c.h.b16 %v45
    %v454 = vunpack.c.l.b16 %v46
    %v455 = vunpack.c.h.b16 %v46
    %v456 = vunpack.c.l.b16 %v47
    %v457 = vunpack.c.h.b16 %v47
    %v458 = vunpack.c.l.b16 %v48
    %v459 = vunpack.c.h.b16 %v48
    %v460 = vunpack.c.l.b16 %v49
    %v461 = vunpack.c.h.b16 %v49
    %v462 = vunpack.c.l.b16 %v50
    %v463 = vunpack.c.h.b16 %v50
    %v464 = vunpack.c.l.b16 %v51
    %v465 = vunpack.c.h.b16 %v51
    %v466 = vunpack.c.l.b16 %v52
    %v467 = vunpack.c.h.b16 %v52
    %v468 = vunpack.c.l.b16 %v53
    %v469 = vunpack.c.h.b16 %v53
    %v470 = vunpack.c.l.b16 %v54
    %v471 = vunpack.c.h.b16 %v54
    %v472 = vunpack.c.l.b16 %v55
    %v473 = vunpack.c.h.b16 %v55
    %v474 = vunpack.c.l.b16 %v56
    %v475 = vunpack.c.h.b16 %v56
    %v476 = vunpack.c.l.b16 %v57
    %v477 = vunpack.c.h.b16 %v57
    %v478 = vunpack.c.l.b16 %v58
    %v479 = vunpack.c.h.b16 %v58
    %v480 = vunpack.c.l.b16 %v59
    %v481 = vunpack.c.h.b16 %v59
    %v482 = vunpack.c.l.b16 %v60
    %v483 = vunpack.c.h.b16 %v60
    %v484 = vunpack.c.l.b16 %v61
    %v485 = vunpack.c.h.b16 %v61
    %v486 = vunpack.c.l.b16 %v62
    %v487 = vunpack.c.h.b16 %v62
    %v488 = vunpack.c.l.b16 %v63
    %v489 = vunpack.c.h.b16 %v63
    %v490 = vunpack.c.l.b16 %v64
    %v491 = vunpack.c.h.b16 %v64
    %v492 = vunpack.c.l.b16 %v65
    %v493 = vunpack.c.h.b16 %v65
    %v494 = vunpack.c.l.b16 %v66
    %v495 = vunpack.c.h.b16 %v66
    %v496 = vunpack.c.l.b16 %v67
    %v497 = vunpack.c.h.b16 %v67
    %v498 = vunpack.c.l.b16 %v68
    %v499 = vunpack.c.h.b16 %v68
    %v500 = vunpack.c.l.b16 %v69
    %v501 = vunpack.c.h.b16 %v69
    %v502 = vunpack.c.l.b16 %v70
    %v503 = vunpack.c.h.b16 %v70
    %v504 = vunpack.c.l.b16 %v71
    %v505 = vunpack.c.h.b16 %v71
    %v506 = vunpack.c.l.b16 %v72
    %v507 = vunpack.c.h.b16 %v72
    %v508 = vunpack.c.l.b16 %v73
    %v509 = vunpack.c.h.b16 %v73
    %v510 = vunpack.c.l.b16 %v74
    %v511 = vunpack.c.h.b16 %v74
    %v512 = vunpack.c.l.b16 %v75
    %v513 = vunpack.c.h.b16 %v75
    %v514 = vunpack.c.l.b16 %v76
    %v515 = vunpack.c.h.b16 %v76
    %v516 = vunpack.c.l.b16 %v77
    %v517 = vunpack.c.h.b16 %v77
    %v518 = vunpack.c.l.b16 %v78
    %v519 = vunpack.c.h.b16 %v78
    %v520 = vunpack.c.l.b16 %v79
    %v521 = vunpack.c.h.b16 %v79
    %v522 = vunpack.c.l.b16 %v80
    %v523 = vunpack.c.h.b16 %v80
    %v524 = vunpack.c.l.b16 %v81
    %v525 = vunpack.c.h.b16 %v81
    %v526 = vunpack.c.l.b16 %v82
    %v527 = vunpack.c.h.b16 %v82
    %v528 = vunpack.c.l.b16 %v83
    %v529 = vunpack.c.h.b16 %v83
    %v530 = vunpack.c.l.b16 %v84
    %v531 = vunpack.c.h.b16 %v84
    %v532 = vunpack.c.l.b16 %v85
    %v533 = vunpack.c.h.b16 %v85
    %v534 = vunpack.c.l.b16 %v86
    %v535 = vunpack.c.h.b16 %v86
    %v536 = vunpack.c.l.b16 %v87
    %v537 = vunpack.c.h.b16 %v87
    %v538 = vunpack.c.l.b16 %v88
    %v539 = vunpack.c.h.b16 %v88
    %v540 = vunpack.c.l.b16 %v89
    %v541 = vunpack.c.h.b16 %v89
    %v542 = vunpack.c.l.b16 %v90
    %v543 = vunpack.c.h.b16 %v90
    %v544 = vunpack.c.l.b16 %v91
    %v545 = vunpack.c.h.b16 %v91
    %v546 = vunpack.c.l.b16 %v92
    %v547 = vunpack.c.h.b16 %v92
    %v548 = vunpack.c.l.b16 %v93
    %v549 = vunpack.c.h.b16 %v93
    %v550 = vunpack.c.l.b16 %v94
    %v551 = vunpack.c.h.b16 %v94
    %v552 = vunpack.c.l.b16 %v95
    %v553 = vunpack.c.h.b16 %v95
    %v554 = vunpack.c.l.b16 %v96
    %v555 = vunpack.c.h.b16 %v96
    %v556 = vunpack.c.l.b16 %v97
    %v557 = vunpack.c.h.b16 %v97
    %v558 = vunpack.c.l.b16 %v98
    %v559 = vunpack.c.h.b16 %v98
    %v560 = vunpack.c.l.b16 %v99
    %v561 = vunpack.c.h.b16 %v99
    %v562 = vunpack.c.l.b16 %v100
    %v563 = vunpack.c.h.b16 %v100
    %v564 = vunpack.c.l.b16 %v101
    %v565 = vunpack.c.h.b16 %v101
    %v566 = vunpack.c.l.b16 %v102
    %v567 = vunpack.c.h.b16 %v102
    %v568 = vunpack.c.l.b16 %v103
    %v569 = vunpack.c.h.b16 %v103
    %v570 = vunpack.c.l.b16 %v104
    %v571 = vunpack.c.h.b16 %v104
    %v572 = vunpack.c.l.b16 %v105
    %v573 = vunpack.c.h.b16 %v105
    %v574 = vunpack.c.l.b16 %v106
    %v575 = vunpack.c.h.b16 %v106
    %v576 = vunpack.c.l.b16 %v107
    %v577 = vunpack.c.h.b16 %v107
    %v578 = vunpack.c.l.b16 %v108
    %v579 = vunpack.c.h.b16 %v108
    %v580 = vunpack.c.l.b16 %v109
    %v581 = vunpack.c.h.b16 %v109
    %v582 = vunpack.c.l.b16 %v110
    %v583 = vunpack.c.h.b16 %v110
    %v584 = vunpack.c.l.b16 %v111
    %v585 = vunpack.c.h.b16 %v111
    %v586 = vunpack.c.l.b16 %v112
    %v587 = vunpack.c.h.b16 %v112
    %v588 = vunpack.c.l.b16 %v113
    %v589 = vunpack.c.h.b16 %v113
    %v590 = vunpack.c.l.b16 %v114
    %v591 = vunpack.c.h.b16 %v114
    %v592 = vunpack.c.l.b16 %v115
    %v593 = vunpack.c.h.b16 %v115
    %v594 = vunpack.c.l.b16 %v116
    %v595 = vunpack.c.h.b16 %v116
    %v596 = vunpack.c.l.b16 %v117
    %v597 = vunpack.c.h.b16 %v117
    %v598 = vunpack.c.l.b16 %v118
    %v599 = vunpack.c.h.b16 %v118
    %v600 = vunpack.c.l.b16 %v119
    %v601 = vunpack.c.h.b16 %v119
    %v602 = vunpack.c.l.b16 %v120
    %v603 = vunpack.c.h.b16 %v120
    %v604 = vunpack.c.l.b16 %v121
    %v605 = vunpack.c.h.b16 %v121
    %v606 = vunpack.c.l.b16 %v122
    %v607 = vunpack.c.h.b16 %v122
    %v608 = vunpack.c.l.b16 %v123
    %v609 = vunpack.c.h.b16 %v123
    %v610 = vunpack.c.l.b16 %v124
    %v611 = vunpack.c.h.b16 %v124
    %v612 = vunpack.c.l.b16 %v125
    %v613 = vunpack.c.h.b16 %v125
    %v614 = vunpack.c.l.b16 %v126
    %v615 = vunpack.c.h.b16 %v126
    %v616 = vunpack.c.l.b16 %v127
    %v617 = vunpack.c.h.b16 %v127
    %v618 = vunpack.c.l.b16 %v128
    %v619 = vunpack.c.h.b16 %v128
    %v620 = vunpack.c.l.b16 %v129
    %v621 = vunpack.c.h.b16 %v129
    %v622 = vunpack.c.l.b16 %v130
    %v623 = vunpack.c.h.b16 %v130
    %v624 = vunpack.c.l.b16 %v131
    %v625 = vunpack.c.h.b16 %v131
    %v626 = vunpack.c.l.b16 %v132
    %v627 = vunpack.c.h.b16 %v132
    %v628 = vunpack.c.l.b16 %v133
    %v629 = vunpack.c.h.b16 %v133
    %v630 = vunpack.c.l.b16 %v134
    %v631 = vunpack.c.h.b16 %v134
    %v632 = vunpack.c.l.b16 %v135
    %v633 = vunpack.c.h.b16 %v135
    %v634 = vunpack.c.l.b16 %v136
    %v635 = vunpack.c.h.b16 %v136
    %v636 = vunpack.c.l.b16 %v137
    %v637 = vunpack.c.h.b16 %v137
    %v638 = vunpack.c.l.b16 %v138
    %v639 = vunpack.c.h.b16 %v138
    %v640 = vunpack.c.l.b16 %v139
    %v641 = vunpack.c.h.b16 %v139
    %v642 = vunpack.c.l.b16 %v140
    %v643 = vunpack.c.h.b16 %v140
    %v644 = vunpack.c.l.b16 %v141
    %v645 = vunpack.c.h.b16 %v141
    %v646 = vunpack.c.l.b16 %v142
    %v647 = vunpack.c.h.b16 %v142
    %v648 = vunpack.c.l.b16 %v143
    %v649 = vunpack.c.h.b16 %v143
    %v650 = vunpack.c.l.b16 %v144
    %v651 = vunpack.c.h.b16 %v144
    %v652 = vunpack.c.l.b16 %v145
    %v653 = vunpack.c.h.b16 %v145
    %v654 = vunpack.c.l.b16 %v146
    %v655 = vunpack.c.h.b16 %v146
    %v656 = vunpack.c.l.b16 %v147
    %v657 = vunpack.c.h.b16 %v147
    %v658 = vunpack.c.l.b16 %v148
    %v659 = vunpack.c.h.b16 %v148
    %v660 = vunpack.c.l.b16 %v149
    %v661 = vunpack.c.h.b16 %v149
    %v662 = vunpack.c.l.b16 %v150
    %v663 = vunpack.c.h.b16 %v150
    %v664 = vunpack.c.l.b16 %v151
    %v665 = vunpack.c.h.b16 %v151
    %v666 = vunpack.c.l.b16 %v152
    %v667 = vunpack.c.h.b16 %v152
    %v668 = vunpack.c.l.b16 %v153
    %v669 = vunpack.c.h.b16 %v153
    %v670 = vunpack.c.l.b16 %v154
    %v671 = vunpack.c.h.b16 %v154
    %v672 = vunpack.c.l.b16 %v155
    %v673 = vunpack.c.h.b16 %v155
    %v674 = vunpack.c.l.b16 %v156
    %v675 = vunpack.c.h.b16 %v156
    %v676 = vunpack.c.l.b16 %v157
    %v677 = vunpack.c.h.b16 %v157
    %v678 = vunpack.c.l.b16 %v158
    %v679 = vunpack.c.h.b16 %v158
    %v680 = vunpack.c.l.b16 %v159
    %v681 = vunpack.c.h.b16 %v159
    %v682 = vunpack.c.l.b16 %v160
    %v683 = vunpack.c.h.b16 %v160
    %v684 = vunpack.c.l.b16 %v161
    %v685 = vunpack.c.h.b16 %v161
    %v686 = vunpack.c.l.b16 %v162
    %v687 = vunpack.c.h.b16 %v162
    %v688 = vunpack.c.l.b16 %v163
    %v689 = vunpack.c.h.b16 %v163
    %v690 = vunpack.c.l.b16 %v164
    %v691 = vunpack.c.h.b16 %v164
    %v692 = vunpack.c.l.b16 %v165
    %v693 = vunpack.c.h.b16 %v165
    %v694 = vunpack.c.l.b16 %v166
    %v695 = vunpack.c.h.b16 %v166
    %v696 = vunpack.c.l.b16 %v167
    %v697 = vunpack.c.h.b16 %v167
    %v698 = vunpack.c.l.b16 %v168
    %v699 = vunpack.c.h.b16 %v168
    %v700 = vunpack.c.l.b16 %v169
    %v701 = vunpack.c.h.b16 %v169
    %v702 = vunpack.c.l.b16 %v170
    %v703 = vunpack.c.h.b16 %v170
    %v704 = vunpack.c.l.b16 %v171
    %v705 = vunpack.c.h.b16 %v171
    %v706 = vunpack.c.l.b16 %v172
    %v707 = vunpack.c.h.b16 %v172
    %v708 = vunpack.c.l.b16 %v173
    %v709 = vunpack.c.h.b16 %v173
    %v710 = vunpack.c.l.b16 %v174
    %v711 = vunpack.c.h.b16 %v174
    %v712 = vunpack.c.l.b16 %v175
    %v713 = vunpack.c.h.b16 %v175
    %v714 = vunpack.c.l.b16 %v176
    %v715 = vunpack.c.h.b16 %v176
    %v716 = vunpack.c.l.b16 %v177
    %v717 = vunpack.c.h.b16 %v177
    %v718 = vunpack.c.l.b16 %v178
    %v719 = vunpack.c.h.b16 %v178
    %v720 = vunpack.c.l.b16 %v179
    %v721 = vunpack.c.h.b16 %v179
    %v722 = vunpack.c.l.b16 %v180
    %v723 = vunpack.c.h.b16 %v180
    %v724 = vunpack.c.l.b16 %v181
    %v725 = vunpack.c.h.b16 %v181
    %v726 = vunpack.c.l.b16 %v182
    %v727 = vunpack.c.h.b16 %v182
    %v728 = vunpack.c.l.b16 %v183
    %v729 = vunpack.c.h.b16 %v183
    %v730 = vunpack.c.l.b16 %v184
    %v731 = vunpack.c.h.b16 %v184
    %v732 = vunpack.c.l.b16 %v185
    %v733 = vunpack.c.h.b16 %v185
    %v734 = vunpack.c.l.b16 %v186
    %v735 = vunpack.c.h.b16 %v186
    %v736 = vunpack.c.l.b16 %v187
    %v737 = vunpack.c.h.b16 %v187
    %v738 = vunpack.c.l.b16 %v188
    %v739 = vunpack.c.h.b16 %v188
    %v740 = vunpack.c.l.b16 %v189
    %v741 = vunpack.c.h.b16 %v189
    %v742 = vunpack.c.l.b16 %v190
    %v743 = vunpack.c.h.b16 %v190
    %v744 = vunpack.c.l.b16 %v191
    %v745 = vunpack.c.h.b16 %v191
    %v746 = vunpack.c.l.b16 %v192
    %v747 = vunpack.c.h.b16 %v192
    %v748 = vunpack.c.l.b16 %v193
    %v749 = vunpack.c.h.b16 %v193
    %v750 = vunpack.c.l.b16 %v194
    %v751 = vunpack.c.h.b16 %v194
    %v752 = vunpack.c.l.b16 %v195
    %v753 = vunpack.c.h.b16 %v195
    %v754 = vunpack.c.l.b16 %v196
    %v755 = vunpack.c.h.b16 %v196
    %v756 = vunpack.c.l.b16 %v197
    %v757 = vunpack.c.h.b16 %v197
    %v758 = vunpack.c.l.b16 %v198
    %v759 = vunpack.c.h.b16 %v198
    %v760 = vunpack.c.l.b16 %v199
    %v761 = vunpack.c.h.b16 %v199
    %v762 = vunpack.c.l.b16 %v200
    %v763 = vunpack.c.h.b16 %v200
    %v764 = vunpack.c.l.b16 %v201
    %v765 = vunpack.c.h.b16 %v201
    %v766 = vunpack.c.l.b16 %v202
    %v767 = vunpack.c.h.b16 %v202
    %v768 = vunpack.c.l.b16 %v203
    %v769 = vunpack.c.h.b16 %v203
    %v770 = vunpack.c.l.b16 %v204
    %v771 = vunpack.c.h.b16 %v204
    %v772 = vunpack.c.l.b16 %v205
    %v773 = vunpack.c.h.b16 %v205
    %v774 = vunpack.c.l.b16 %v206
    %v775 = vunpack.c.h.b16 %v206
    %v776 = vunpack.c.l.b16 %v207
    %v777 = vunpack.c.h.b16 %v207
    %v778 = vunpack.c.l.b16 %v208
    %v779 = vunpack.c.h.b16 %v208
    %v780 = vunpack.c.l.b16 %v209
    %v781 = vunpack.c.h.b16 %v209
    %v782 = vunpack.c.l.b16 %v210
    %v783 = vunpack.c.h.b16 %v210
    %v784 = vunpack.c.l.b16 %v211
    %v785 = vunpack.c.h.b16 %v211
    %v786 = vunpack.c.l.b16 %v212
    %v787 = vunpack.c.h.b16 %v212
    %v788 = vunpack.c.l.b16 %v213
    %v789 = vunpack.c.h.b16 %v213
    %v790 = vunpack.c.l.b16 %v214
    %v791 = vunpack.c.h.b16 %v214
    %v792 = vunpack.c.l.b16 %v215
    %v793 = vunpack.c.h.b16 %v215
    %v794 = vunpack.c.l.b16 %v216
    %v795 = vunpack.c.h.b16 %v216
    %v796 = vunpack.c.l.b16 %v217
    %v797 = vunpack.c.h.b16 %v217
    %v798 = vunpack.c.l.b16 %v218
    %v799 = vunpack.c.h.b16 %v218
    %v800 = vunpack.c.l.b16 %v219
    %v801 = vunpack.c.h.b16 %v219
    %v802 = vunpack.c.l.b16 %v220
    %v803 = vunpack.c.h.b16 %v220
    %v804 = vunpack.c.l.b16 %v221
    %v805 = vunpack.c.h.b16 %v221
    %v806 = vunpack.c.l.b16 %v222
    %v807 = vunpack.c.h.b16 %v222
    %v808 = vunpack.c.l.b16 %v223
    %v809 = vunpack.c.h.b16 %v223
    %v810 = vunpack.c.l.b16 %v224
    %v811 = vunpack.c.h.b16 %v224
    %v812 = vunpack.c.l.b16 %v225
    %v813 = vunpack.c.h.b16 %v225
    %v814 = vunpack.c.l.b16 %v226
    %v815 = vunpack.c.h.b16 %v226
    %v816 = vunpack.c.l.b16 %v227
    %v817 = vunpack.c.h.b16 %v227
    %v818 = vunpack.c.l.b16 %v228
    %v819 = vunpack.c.h.b16 %v228
    %v820 = vunpack.c.l.b16 %v229
    %v821 = vunpack.c.h.b16 %v229
    %v822 = vunpack.c.l.b16 %v230
    %v823 = vunpack.c.h.b16 %v230
    %v824 = vunpack.c.l.b16 %v231
    %v825 = vunpack.c.h.b16 %v231
    %v826 = vunpack.c.l.b16 %v232
    %v827 = vunpack.c.h.b16 %v232
    %v828 = vunpack.c.l.b16 %v233
    %v829 = vunpack.c.h.b16 %v233
    %v830 = vunpack.c.l.b16 %v234
    %v831 = vunpack.c.h.b16 %v234
    %v832 = vunpack.c.l.b16 %v235
    %v833 = vunpack.c.h.b16 %v235
    %v834 = vunpack.c.l.b16 %v236
    %v835 = vunpack.c.h.b16 %v236
    %v836 = vunpack.c.l.b16 %v237
    %v837 = vunpack.c.h.b16 %v237
    %v838 = vunpack.c.l.b16 %v238
    %v839 = vunpack.c.h.b16 %v238
    %v840 = vpack.c.b16 %v444, %v440
    %v841 = vpack.c.b16 %v445, %v441
    %v842 = vpack.c.b16 %v446, %v442
    %v843 = vpack.c.b16 %v447, %v443
    %v844 = vpack.c.b16 %v452, %v448
    %v845 = vpack.c.b16 %v453, %v449
    %v846 = vpack.c.b16 %v454, %v450
    %v847 = vpack.c.b16 %v455, %v451
    %v848 = vpack.c.b16 %v460, %v456
    %v849 = vpack.c.b16 %v461, %v457
    %v850 = vpack.c.b16 %v462, %v458
    %v851 = vpack.c.b16 %v463, %v459
    %v852 = vpack.c.b16 %v468, %v464
    %v853 = vpack.c.b16 %v469, %v465
    %v854 = vpack.c.b16 %v470, %v466
    %v855 = vpack.c.b16 %v471, %v467
    %v856 = vpack.c.b16 %v476, %v472
    %v857 = vpack.c.b16 %v477, %v473
    %v858 = vpack.c.b16 %v478, %v474
    %v859 = vpack.c.b16 %v479, %v475
    %v860 = vpack.c.b16 %v484, %v480
    %v861 = vpack.c.b16 %v485, %v481
    %v862 = vpack.c.b16 %v486, %v482
    %v863 = vpack.c.b16 %v487, %v483
    %v864 = vpack.c.b16 %v492, %v488
    %v865 = vpack.c.b16 %v493, %v489
    %v866 = vpack.c.b16 %v494, %v490
    %v867 = vpack.c.b16 %v495, %v491
    %v868 = vpack.c.b16 %v500, %v496
    %v869 = vpack.c.b16 %v501, %v497
    %v870 = vpack.c.b16 %v502, %v498
    %v871 = vpack.c.b16 %v503, %v499
    %v872 = vpack.c.b16 %v508, %v504
    %v873 = vpack.c.b16 %v509, %v505
    %v874 = vpack.c.b16 %v510, %v506
    %v875 = vpack.c.b16 %v511, %v507
    %v876 = vpack.c.b16 %v516, %v512
    %v877 = vpack.c.b16 %v517, %v513
    %v878 = vpack.c.b16 %v518, %v514
    %v879 = vpack.c.b16 %v519, %v515
    %v880 = vpack.c.b16 %v524, %v520
    %v881 = vpack.c.b16 %v525, %v521
    %v882 = vpack.c.b16 %v526, %v522
    %v883 = vpack.c.b16 %v527, %v523
    %v884 = vpack.c.b16 %v532, %v528
    %v885 = vpack.c.b16 %v533, %v529
    %v886 = vpack.c.b16 %v534, %v530
    %v887 = vpack.c.b16 %v535, %v531
    %v888 = vpack.c.b16 %v540, %v536
    %v889 = vpack.c.b16 %v541, %v537
    %v890 = vpack.c.b16 %v542, %v538
    %v891 = vpack.c.b16 %v543, %v539
    %v892 = vpack.c.b16 %v548, %v544
    %v893 = vpack.c.b16 %v549, %v545
    %v894 = vpack.c.b16 %v550, %v546
    %v895 = vpack.c.b16 %v551, %v547
    %v896 = vpack.c.b16 %v556, %v552
    %v897 = vpack.c.b16 %v557, %v553
    %v898 = vpack.c.b16 %v558, %v554
    %v899 = vpack.c.b16 %v559, %v555
    %v900 = vpack.c.b16 %v564, %v560
    %v901 = vpack.c.b16 %v565, %v561
    %v902 = vpack.c.b16 %v566, %v562
    %v903 = vpack.c.b16 %v567, %v563
    %v904 = vpack.c.b16 %v572, %v568
    %v905 = vpack.c.b16 %v573, %v569
    %v906 = vpack.c.b16 %v574, %v570
    %v907 = vpack.c.b16 %v575, %v571
    %v908 = vpack.c.b16 %v580, %v576
    %v909 = vpack.c.b16 %v581, %v577
    %v910 = vpack.c.b16 %v582, %v578
    %v911 = vpack.c.b16 %v583, %v579
    %v912 = vpack.c.b16 %v588, %v584
    %v913 = vpack.c.b16 %v589, %v585
    %v914 = vpack.c.b16 %v590, %v586
    %v915 = vpack.c.b16 %v591, %v587
    %v916 = vpack.c.b16 %v596, %v592
    %v917 = vpack.c.b16 %v597, %v593
    %v918 = vpack.c.b16 %v598, %v594
    %v919 = vpack.c.b16 %v599, %v595
    %v920 = vpack.c.b16 %v604, %v600
    %v921 = vpack.c.b16 %v605, %v601
    %v922 = vpack.c.b16 %v606, %v602
    %v923 = vpack.c.b16 %v607, %v603
    %v924 = vpack.c.b16 %v612, %v608
    %v925 = vpack.c.b16 %v613, %v609
    %v926 = vpack.c.b16 %v614, %v610
    %v927 = vpack.c.b16 %v615, %v611
    %v928 = vpack.c.b16 %v620, %v616
    %v929 = vpack.c.b16 %v621, %v617
    %v930 = vpack.c.b16 %v622, %v618
    %v931 = vpack.c.b16 %v623, %v619
    %v932 = vpack.c.b16 %v628, %v624
    %v933 = vpack.c.b16 %v629, %v625
    %v934 = vpack.c.b16 %v630, %v626
    %v935 = vpack.c.b16 %v631, %v627
    %v936 = vpack.c.b16 %v636, %v632
    %v937 = vpack.c.b16 %v637, %v633
    %v938 = vpack.c.b16 %v638, %v634
    %v939 = vpack.c.b16 %v639, %v635
    %v940 = vpack.c.b16 %v644, %v640
    %v941 = vpack.c.b16 %v645, %v641
    %v942 = vpack.c.b16 %v646, %v642
    %v943 = vpack.c.b16 %v647, %v643
    %v944 = vpack.c.b16 %v652, %v648
    %v945 = vpack.c.b16 %v653, %v649
    %v946 = vpack.c.b16 %v654, %v650
    %v947 = vpack.c.b16 %v655, %v651
    %v948 = vpack.c.b16 %v660, %v656
    %v949 = vpack.c.b16 %v661, %v657
    %v950 = vpack.c.b16 %v662, %v658
    %v951 = vpack.c.b16 %v663, %v659
    %v952 = vpack.c.b16 %v668, %v664
    %v953 = vpack.c.b16 %v669, %v665
    %v954 = vpack.c.b16 %v670, %v666
    %v955 = vpack.c.b16 %v671, %v667
    %v956 = vpack.c.b16 %v676, %v672
    %v957 = vpack.c.b16 %v677, %v673
    %v958 = vpack.c.b16 %v678, %v674
    %v959 = vpack.c.b16 %v679, %v675
    %v960 = vpack.c.b16 %v684, %v680
    %v961 = vpack.c.b16 %v685, %v681
    %v962 = vpack.c.b16 %v686, %v682
    %v963 = vpack.c.b16 %v687, %v683
    %v964 = vpack.c.b16 %v692, %v688
    %v965 = vpack.c.b16 %v693, %v689
    %v966 = vpack.c.b16 %v694, %v690
    %v967 = vpack.c.b16 %v695, %v691
    %v968 = vpack.c.b16 %v700, %v696
    %v969 = vpack.c.b16 %v701, %v697
    %v970 = vpack.c.b16 %v702, %v698
    %v971 = vpack.c.b16 %v703, %v699
    %v972 = vpack.c.b16 %v708, %v704
    %v973 = vpack.c.b16 %v709, %v705
    %v974 = vpack.c.b16 %v710, %v706
    %v975 = vpack.c.b16 %v711, %v707
    %v976 = vpack.c.b16 %v716, %v712
    %v977 = vpack.c.b16 %v717, %v713
    %v978 = vpack.c.b16 %v718, %v714
    %v979 = vpack.c.b16 %v719, %v715
    %v980 = vpack.c.b16 %v724, %v720
    %v981 = vpack.c.b16 %v725, %v721
    %v982 = vpack.c.b16 %v726, %v722
    %v983 = vpack.c.b16 %v727, %v723
    %v984 = vpack.c.b16 %v732, %v728
    %v985 = vpack.c.b16 %v733, %v729
    %v986 = vpack.c.b16 %v734, %v730
    %v987 = vpack.c.b16 %v735, %v731
    %v988 = vpack.c.b16 %v740, %v736
    %v989 = vpack.c.b16 %v741, %v737
    %v990 = vpack.c.b16 %v742, %v738
    %v991 = vpack.c.b16 %v743, %v739
    %v992 = vpack.c.b16 %v748, %v744
    %v993 = vpack.c.b16 %v749, %v745
    %v994 = vpack.c.b16 %v750, %v746
    %v995 = vpack.c.b16 %v751, %v747
    %v996 = vpack.c.b16 %v756, %v752
    %v997 = vpack.c.b16 %v757, %v753
    %v998 = vpack.c.b16 %v758, %v754
    %v999 = vpack.c.b16 %v759, %v755
    %v1000 = vpack.c.b16 %v764, %v760
    %v1001 = vpack.c.b16 %v765, %v761
    %v1002 = vpack.c.b16 %v766, %v762
    %v1003 = vpack.c.b16 %v767, %v763
    %v1004 = vpack.c.b16 %v772, %v768
    %v1005 = vpack.c.b16 %v773, %v769
    %v1006 = vpack.c.b16 %v774, %v770
    %v1007 = vpack.c.b16 %v775, %v771
    %v1008 = vpack.c.b16 %v780, %v776
    %v1009 = vpack.c.b16 %v781, %v777
    %v1010 = vpack.c.b16 %v782, %v778
    %v1011 = vpack.c.b16 %v783, %v779
    %v1012 = vpack.c.b16 %v788, %v784
    %v1013 = vpack.c.b16 %v789, %v785
    %v1014 = vpack.c.b16 %v790, %v786
    %v1015 = vpack.c.b16 %v791, %v787
    %v1016 = vpack.c.b16 %v796, %v792
    %v1017 = vpack.c.b16 %v797, %v793
    %v1018 = vpack.c.b16 %v798, %v794
    %v1019 = vpack.c.b16 %v799, %v795
    %v1020 = vpack.c.b16 %v804, %v800
    %v1021 = vpack.c.b16 %v805, %v801
    %v1022 = vpack.c.b16 %v806, %v802
    %v1023 = vpack.c.b16 %v807, %v803
    %v1024 = vpack.c.b16 %v812, %v808
    %v1025 = vpack.c.b16 %v813, %v809
    %v1026 = vpack.c.b16 %v814, %v810
    %v1027 = vpack.c.b16 %v815, %v811
    %v1028 = vpack.c.b16 %v820, %v816
    %v1029 = vpack.c.b16 %v821, %v817
    %v1030 = vpack.c.b16 %v822, %v818
    %v1031 = vpack.c.b16 %v823, %v819
    %v1032 = vpack.c.b16 %v828, %v824
    %v1033 = vpack.c.b16 %v829, %v825
    %v1034 = vpack.c.b16 %v830, %v826
    %v1035 = vpack.c.b16 %v831, %v827
    %v1036 = vpack.c.b16 %v836, %v832
    %v1037 = vpack.c.b16 %v837, %v833
    %v1038 = vpack.c.b16 %v838, %v834
    %v1039 = vpack.c.b16 %v839, %v835
    %v1241 = vperm.slane %v239, 0
    %v1242 = vperm.slane %v239, 1
    %v1243 = vperm.slane %v239, 2
    %v1244 = vperm.slane %v239, 3
    %vm1249 = vcmask 261120
    %v1251 = vsel %vm1249, %v38, 0
    %1253 = vmatpush.bf16.msra.mxu0 %v868
    %1254 = vmatpush.bf16.msra.mxu0 %v864
    %1255 = vmatpush.bf16.msra.mxu0 %v860
    %1256 = vmatpush.bf16.msra.mxu0 %v856
    %1257 = vmatpush.bf16.msra.mxu0 %v852
    %1258 = vmatpush.bf16.msra.mxu0 %v848
    %1259 = vmatpush.bf16.msra.mxu0 %v844
    %1260 = vmatpush.bf16.msra.mxu0 %v840
    %1261 = vmatmul.bf16.gmra.mxu0 %v32
    %v1262 = vpop.f32.mrf.mxu0
    %v1263 = vadd.f32 %v1241, %v1262
    %v1264 = vpop.f32.mrf.mxu0
    %1265 = vdwg.mxu0
    %1266 = vmatpush.bf16.msra.mxu0 %v900
    %1267 = vmatpush.bf16.msra.mxu0 %v896
    %1268 = vmatpush.bf16.msra.mxu0 %v892
    %1269 = vmatpush.bf16.msra.mxu0 %v888
    %1270 = vmatpush.bf16.msra.mxu0 %v884
    %1271 = vmatpush.bf16.msra.mxu0 %v880
    %1272 = vmatpush.bf16.msra.mxu0 %v876
    %1273 = vmatpush.bf16.msra.mxu0 %v872
    %1274 = vmatmul.bf16.gmra.mxu0 %v33
    %v1275 = vpop.f32.mrf.mxu0
    %v1276 = vadd.f32 %v1263, %v1275
    %v1277 = vpop.f32.mrf.mxu0
    %1278 = vdwg.mxu0
    %1279 = vmatpush.bf16.msra.mxu0 %v932
    %1280 = vmatpush.bf16.msra.mxu0 %v928
    %1281 = vmatpush.bf16.msra.mxu0 %v924
    %1282 = vmatpush.bf16.msra.mxu0 %v920
    %1283 = vmatpush.bf16.msra.mxu0 %v916
    %1284 = vmatpush.bf16.msra.mxu0 %v912
    %1285 = vmatpush.bf16.msra.mxu0 %v908
    %1286 = vmatpush.bf16.msra.mxu0 %v904
    %1287 = vmatmul.bf16.gmra.mxu0 %v34
    %v1288 = vpop.f32.mrf.mxu0
    %v1289 = vadd.f32 %v1276, %v1288
    %v1290 = vpop.f32.mrf.mxu0
    %1291 = vdwg.mxu0
    %1292 = vmatpush.bf16.msra.mxu0 %v964
    %1293 = vmatpush.bf16.msra.mxu0 %v960
    %1294 = vmatpush.bf16.msra.mxu0 %v956
    %1295 = vmatpush.bf16.msra.mxu0 %v952
    %1296 = vmatpush.bf16.msra.mxu0 %v948
    %1297 = vmatpush.bf16.msra.mxu0 %v944
    %1298 = vmatpush.bf16.msra.mxu0 %v940
    %1299 = vmatpush.bf16.msra.mxu0 %v936
    %1300 = vmatmul.bf16.gmra.mxu0 %v35
    %v1301 = vpop.f32.mrf.mxu0
    %v1302 = vadd.f32 %v1289, %v1301
    %v1303 = vpop.f32.mrf.mxu0
    %1304 = vdwg.mxu0
    %1305 = vmatpush.bf16.msra.mxu0 %v996
    %1306 = vmatpush.bf16.msra.mxu0 %v992
    %1307 = vmatpush.bf16.msra.mxu0 %v988
    %1308 = vmatpush.bf16.msra.mxu0 %v984
    %1309 = vmatpush.bf16.msra.mxu0 %v980
    %1310 = vmatpush.bf16.msra.mxu0 %v976
    %1311 = vmatpush.bf16.msra.mxu0 %v972
    %1312 = vmatpush.bf16.msra.mxu0 %v968
    %1313 = vmatmul.bf16.gmra.mxu0 %v36
    %v1314 = vpop.f32.mrf.mxu0
    %v1315 = vadd.f32 %v1302, %v1314
    %v1316 = vpop.f32.mrf.mxu0
    %1317 = vdwg.mxu0
    %1318 = vmatpush.bf16.msra.mxu0 %v1028
    %1319 = vmatpush.bf16.msra.mxu0 %v1024
    %1320 = vmatpush.bf16.msra.mxu0 %v1020
    %1321 = vmatpush.bf16.msra.mxu0 %v1016
    %1322 = vmatpush.bf16.msra.mxu0 %v1012
    %1323 = vmatpush.bf16.msra.mxu0 %v1008
    %1324 = vmatpush.bf16.msra.mxu0 %v1004
    %1325 = vmatpush.bf16.msra.mxu0 %v1000
    %1326 = vmatmul.bf16.gmra.mxu0 %v37
    %v1327 = vpop.f32.mrf.mxu0
    %v1328 = vadd.f32 %v1315, %v1327
    %v1329 = vpop.f32.mrf.mxu0
    %1330 = vdwg.mxu0
    %1331 = vmatpush.bf16.msra.mxu0 0
    %1332 = vmatpush.bf16.msra.mxu0 0
    %1333 = vmatpush.bf16.msra.mxu0 0
    %1334 = vmatpush.bf16.msra.mxu0 0
    %1335 = vmatpush.bf16.msra.mxu0 0
    %1336 = vmatpush.bf16.msra.mxu0 0
    %1337 = vmatpush.bf16.msra.mxu0 %v1036
    %1338 = vmatpush.bf16.msra.mxu0 %v1032
    %1339 = vmatmul.bf16.gmra.mxu0 %v1251
    %v1340 = vpop.f32.mrf.mxu0
    %v1341 = vadd.f32 %v1328, %v1340
    %v1342 = vpop.f32.mrf.mxu0
    %1343 = vdwg.mxu0
    %1344 = vmatpush.bf16.msra.mxu0 %v869
    %1345 = vmatpush.bf16.msra.mxu0 %v865
    %1346 = vmatpush.bf16.msra.mxu0 %v861
    %1347 = vmatpush.bf16.msra.mxu0 %v857
    %1348 = vmatpush.bf16.msra.mxu0 %v853
    %1349 = vmatpush.bf16.msra.mxu0 %v849
    %1350 = vmatpush.bf16.msra.mxu0 %v845
    %1351 = vmatpush.bf16.msra.mxu0 %v841
    %1352 = vmatmul.bf16.gmra.mxu0 %v32
    %v1353 = vpop.f32.mrf.mxu0
    %v1354 = vadd.f32 %v1242, %v1353
    %v1355 = vpop.f32.mrf.mxu0
    %1356 = vdwg.mxu0
    %1357 = vmatpush.bf16.msra.mxu0 %v901
    %1358 = vmatpush.bf16.msra.mxu0 %v897
    %1359 = vmatpush.bf16.msra.mxu0 %v893
    %1360 = vmatpush.bf16.msra.mxu0 %v889
    %1361 = vmatpush.bf16.msra.mxu0 %v885
    %1362 = vmatpush.bf16.msra.mxu0 %v881
    %1363 = vmatpush.bf16.msra.mxu0 %v877
    %1364 = vmatpush.bf16.msra.mxu0 %v873
    %1365 = vmatmul.bf16.gmra.mxu0 %v33
    %v1366 = vpop.f32.mrf.mxu0
    %v1367 = vadd.f32 %v1354, %v1366
    %v1368 = vpop.f32.mrf.mxu0
    %1369 = vdwg.mxu0
    %1370 = vmatpush.bf16.msra.mxu0 %v933
    %1371 = vmatpush.bf16.msra.mxu0 %v929
    %1372 = vmatpush.bf16.msra.mxu0 %v925
    %1373 = vmatpush.bf16.msra.mxu0 %v921
    %1374 = vmatpush.bf16.msra.mxu0 %v917
    %1375 = vmatpush.bf16.msra.mxu0 %v913
    %1376 = vmatpush.bf16.msra.mxu0 %v909
    %1377 = vmatpush.bf16.msra.mxu0 %v905
    %1378 = vmatmul.bf16.gmra.mxu0 %v34
    %v1379 = vpop.f32.mrf.mxu0
    %v1380 = vadd.f32 %v1367, %v1379
    %v1381 = vpop.f32.mrf.mxu0
    %1382 = vdwg.mxu0
    %1383 = vmatpush.bf16.msra.mxu0 %v965
    %1384 = vmatpush.bf16.msra.mxu0 %v961
    %1385 = vmatpush.bf16.msra.mxu0 %v957
    %1386 = vmatpush.bf16.msra.mxu0 %v953
    %1387 = vmatpush.bf16.msra.mxu0 %v949
    %1388 = vmatpush.bf16.msra.mxu0 %v945
    %1389 = vmatpush.bf16.msra.mxu0 %v941
    %1390 = vmatpush.bf16.msra.mxu0 %v937
    %1391 = vmatmul.bf16.gmra.mxu0 %v35
    %v1392 = vpop.f32.mrf.mxu0
    %v1393 = vadd.f32 %v1380, %v1392
    %v1394 = vpop.f32.mrf.mxu0
    %1395 = vdwg.mxu0
    %1396 = vmatpush.bf16.msra.mxu0 %v997
    %1397 = vmatpush.bf16.msra.mxu0 %v993
    %1398 = vmatpush.bf16.msra.mxu0 %v989
    %1399 = vmatpush.bf16.msra.mxu0 %v985
    %1400 = vmatpush.bf16.msra.mxu0 %v981
    %1401 = vmatpush.bf16.msra.mxu0 %v977
    %1402 = vmatpush.bf16.msra.mxu0 %v973
    %1403 = vmatpush.bf16.msra.mxu0 %v969
    %1404 = vmatmul.bf16.gmra.mxu0 %v36
    %v1405 = vpop.f32.mrf.mxu0
    %v1406 = vadd.f32 %v1393, %v1405
    %v1407 = vpop.f32.mrf.mxu0
    %1408 = vdwg.mxu0
    %1409 = vmatpush.bf16.msra.mxu0 %v1029
    %1410 = vmatpush.bf16.msra.mxu0 %v1025
    %1411 = vmatpush.bf16.msra.mxu0 %v1021
    %1412 = vmatpush.bf16.msra.mxu0 %v1017
    %1413 = vmatpush.bf16.msra.mxu0 %v1013
    %1414 = vmatpush.bf16.msra.mxu0 %v1009
    %1415 = vmatpush.bf16.msra.mxu0 %v1005
    %1416 = vmatpush.bf16.msra.mxu0 %v1001
    %1417 = vmatmul.bf16.gmra.mxu0 %v37
    %v1418 = vpop.f32.mrf.mxu0
    %v1419 = vadd.f32 %v1406, %v1418
    %v1420 = vpop.f32.mrf.mxu0
    %1421 = vdwg.mxu0
    %1422 = vmatpush.bf16.msra.mxu0 0
    %1423 = vmatpush.bf16.msra.mxu0 0
    %1424 = vmatpush.bf16.msra.mxu0 0
    %1425 = vmatpush.bf16.msra.mxu0 0
    %1426 = vmatpush.bf16.msra.mxu0 0
    %1427 = vmatpush.bf16.msra.mxu0 0
    %1428 = vmatpush.bf16.msra.mxu0 %v1037
    %1429 = vmatpush.bf16.msra.mxu0 %v1033
    %1430 = vmatmul.bf16.gmra.mxu0 %v1251
    %v1431 = vpop.f32.mrf.mxu0
    %v1432 = vadd.f32 %v1419, %v1431
    %v1433 = vpop.f32.mrf.mxu0
    %1434 = vdwg.mxu0
    %1435 = vmatpush.bf16.msra.mxu0 %v870
    %1436 = vmatpush.bf16.msra.mxu0 %v866
    %1437 = vmatpush.bf16.msra.mxu0 %v862
    %1438 = vmatpush.bf16.msra.mxu0 %v858
    %1439 = vmatpush.bf16.msra.mxu0 %v854
    %1440 = vmatpush.bf16.msra.mxu0 %v850
    %1441 = vmatpush.bf16.msra.mxu0 %v846
    %1442 = vmatpush.bf16.msra.mxu0 %v842
    %1443 = vmatmul.bf16.gmra.mxu0 %v32
    %v1444 = vpop.f32.mrf.mxu0
    %v1445 = vadd.f32 %v1243, %v1444
    %v1446 = vpop.f32.mrf.mxu0
    %1447 = vdwg.mxu0
    %1448 = vmatpush.bf16.msra.mxu0 %v902
    %1449 = vmatpush.bf16.msra.mxu0 %v898
    %1450 = vmatpush.bf16.msra.mxu0 %v894
    %1451 = vmatpush.bf16.msra.mxu0 %v890
    %1452 = vmatpush.bf16.msra.mxu0 %v886
    %1453 = vmatpush.bf16.msra.mxu0 %v882
    %1454 = vmatpush.bf16.msra.mxu0 %v878
    %1455 = vmatpush.bf16.msra.mxu0 %v874
    %1456 = vmatmul.bf16.gmra.mxu0 %v33
    %v1457 = vpop.f32.mrf.mxu0
    %v1458 = vadd.f32 %v1445, %v1457
    %v1459 = vpop.f32.mrf.mxu0
    %1460 = vdwg.mxu0
    %1461 = vmatpush.bf16.msra.mxu0 %v934
    %1462 = vmatpush.bf16.msra.mxu0 %v930
    %1463 = vmatpush.bf16.msra.mxu0 %v926
    %1464 = vmatpush.bf16.msra.mxu0 %v922
    %1465 = vmatpush.bf16.msra.mxu0 %v918
    %1466 = vmatpush.bf16.msra.mxu0 %v914
    %1467 = vmatpush.bf16.msra.mxu0 %v910
    %1468 = vmatpush.bf16.msra.mxu0 %v906
    %1469 = vmatmul.bf16.gmra.mxu0 %v34
    %v1470 = vpop.f32.mrf.mxu0
    %v1471 = vadd.f32 %v1458, %v1470
    %v1472 = vpop.f32.mrf.mxu0
    %1473 = vdwg.mxu0
    %1474 = vmatpush.bf16.msra.mxu0 %v966
    %1475 = vmatpush.bf16.msra.mxu0 %v962
    %1476 = vmatpush.bf16.msra.mxu0 %v958
    %1477 = vmatpush.bf16.msra.mxu0 %v954
    %1478 = vmatpush.bf16.msra.mxu0 %v950
    %1479 = vmatpush.bf16.msra.mxu0 %v946
    %1480 = vmatpush.bf16.msra.mxu0 %v942
    %1481 = vmatpush.bf16.msra.mxu0 %v938
    %1482 = vmatmul.bf16.gmra.mxu0 %v35
    %v1483 = vpop.f32.mrf.mxu0
    %v1484 = vadd.f32 %v1471, %v1483
    %v1485 = vpop.f32.mrf.mxu0
    %1486 = vdwg.mxu0
    %1487 = vmatpush.bf16.msra.mxu0 %v998
    %1488 = vmatpush.bf16.msra.mxu0 %v994
    %1489 = vmatpush.bf16.msra.mxu0 %v990
    %1490 = vmatpush.bf16.msra.mxu0 %v986
    %1491 = vmatpush.bf16.msra.mxu0 %v982
    %1492 = vmatpush.bf16.msra.mxu0 %v978
    %1493 = vmatpush.bf16.msra.mxu0 %v974
    %1494 = vmatpush.bf16.msra.mxu0 %v970
    %1495 = vmatmul.bf16.gmra.mxu0 %v36
    %v1496 = vpop.f32.mrf.mxu0
    %v1497 = vadd.f32 %v1484, %v1496
    %v1498 = vpop.f32.mrf.mxu0
    %1499 = vdwg.mxu0
    %1500 = vmatpush.bf16.msra.mxu0 %v1030
    %1501 = vmatpush.bf16.msra.mxu0 %v1026
    %1502 = vmatpush.bf16.msra.mxu0 %v1022
    %1503 = vmatpush.bf16.msra.mxu0 %v1018
    %1504 = vmatpush.bf16.msra.mxu0 %v1014
    %1505 = vmatpush.bf16.msra.mxu0 %v1010
    %1506 = vmatpush.bf16.msra.mxu0 %v1006
    %1507 = vmatpush.bf16.msra.mxu0 %v1002
    %1508 = vmatmul.bf16.gmra.mxu0 %v37
    %v1509 = vpop.f32.mrf.mxu0
    %v1510 = vadd.f32 %v1497, %v1509
    %v1511 = vpop.f32.mrf.mxu0
    %1512 = vdwg.mxu0
    %1513 = vmatpush.bf16.msra.mxu0 0
    %1514 = vmatpush.bf16.msra.mxu0 0
    %1515 = vmatpush.bf16.msra.mxu0 0
    %1516 = vmatpush.bf16.msra.mxu0 0
    %1517 = vmatpush.bf16.msra.mxu0 0
    %1518 = vmatpush.bf16.msra.mxu0 0
    %1519 = vmatpush.bf16.msra.mxu0 %v1038
    %1520 = vmatpush.bf16.msra.mxu0 %v1034
    %1521 = vmatmul.bf16.gmra.mxu0 %v1251
    %v1522 = vpop.f32.mrf.mxu0
    %v1523 = vadd.f32 %v1510, %v1522
    %v1524 = vpop.f32.mrf.mxu0
    %1525 = vdwg.mxu0
    %1526 = vmatpush.bf16.msra.mxu0 %v871
    %1527 = vmatpush.bf16.msra.mxu0 %v867
    %1528 = vmatpush.bf16.msra.mxu0 %v863
    %1529 = vmatpush.bf16.msra.mxu0 %v859
    %1530 = vmatpush.bf16.msra.mxu0 %v855
    %1531 = vmatpush.bf16.msra.mxu0 %v851
    %1532 = vmatpush.bf16.msra.mxu0 %v847
    %1533 = vmatpush.bf16.msra.mxu0 %v843
    %1534 = vmatmul.bf16.gmra.mxu0 %v32
    %v1535 = vpop.f32.mrf.mxu0
    %v1536 = vadd.f32 %v1244, %v1535
    %v1537 = vpop.f32.mrf.mxu0
    %1538 = vdwg.mxu0
    %1539 = vmatpush.bf16.msra.mxu0 %v903
    %1540 = vmatpush.bf16.msra.mxu0 %v899
    %1541 = vmatpush.bf16.msra.mxu0 %v895
    %1542 = vmatpush.bf16.msra.mxu0 %v891
    %1543 = vmatpush.bf16.msra.mxu0 %v887
    %1544 = vmatpush.bf16.msra.mxu0 %v883
    %1545 = vmatpush.bf16.msra.mxu0 %v879
    %1546 = vmatpush.bf16.msra.mxu0 %v875
    %1547 = vmatmul.bf16.gmra.mxu0 %v33
    %v1548 = vpop.f32.mrf.mxu0
    %v1549 = vadd.f32 %v1536, %v1548
    %v1550 = vpop.f32.mrf.mxu0
    %1551 = vdwg.mxu0
    %1552 = vmatpush.bf16.msra.mxu0 %v935
    %1553 = vmatpush.bf16.msra.mxu0 %v931
    %1554 = vmatpush.bf16.msra.mxu0 %v927
    %1555 = vmatpush.bf16.msra.mxu0 %v923
    %1556 = vmatpush.bf16.msra.mxu0 %v919
    %1557 = vmatpush.bf16.msra.mxu0 %v915
    %1558 = vmatpush.bf16.msra.mxu0 %v911
    %1559 = vmatpush.bf16.msra.mxu0 %v907
    %1560 = vmatmul.bf16.gmra.mxu0 %v34
    %v1561 = vpop.f32.mrf.mxu0
    %v1562 = vadd.f32 %v1549, %v1561
    %v1563 = vpop.f32.mrf.mxu0
    %1564 = vdwg.mxu0
    %1565 = vmatpush.bf16.msra.mxu0 %v967
    %1566 = vmatpush.bf16.msra.mxu0 %v963
    %1567 = vmatpush.bf16.msra.mxu0 %v959
    %1568 = vmatpush.bf16.msra.mxu0 %v955
    %1569 = vmatpush.bf16.msra.mxu0 %v951
    %1570 = vmatpush.bf16.msra.mxu0 %v947
    %1571 = vmatpush.bf16.msra.mxu0 %v943
    %1572 = vmatpush.bf16.msra.mxu0 %v939
    %1573 = vmatmul.bf16.gmra.mxu0 %v35
    %v1574 = vpop.f32.mrf.mxu0
    %v1575 = vadd.f32 %v1562, %v1574
    %v1576 = vpop.f32.mrf.mxu0
    %1577 = vdwg.mxu0
    %1578 = vmatpush.bf16.msra.mxu0 %v999
    %1579 = vmatpush.bf16.msra.mxu0 %v995
    %1580 = vmatpush.bf16.msra.mxu0 %v991
    %1581 = vmatpush.bf16.msra.mxu0 %v987
    %1582 = vmatpush.bf16.msra.mxu0 %v983
    %1583 = vmatpush.bf16.msra.mxu0 %v979
    %1584 = vmatpush.bf16.msra.mxu0 %v975
    %1585 = vmatpush.bf16.msra.mxu0 %v971
    %1586 = vmatmul.bf16.gmra.mxu0 %v36
    %v1587 = vpop.f32.mrf.mxu0
    %v1588 = vadd.f32 %v1575, %v1587
    %v1589 = vpop.f32.mrf.mxu0
    %1590 = vdwg.mxu0
    %1591 = vmatpush.bf16.msra.mxu0 %v1031
    %1592 = vmatpush.bf16.msra.mxu0 %v1027
    %1593 = vmatpush.bf16.msra.mxu0 %v1023
    %1594 = vmatpush.bf16.msra.mxu0 %v1019
    %1595 = vmatpush.bf16.msra.mxu0 %v1015
    %1596 = vmatpush.bf16.msra.mxu0 %v1011
    %1597 = vmatpush.bf16.msra.mxu0 %v1007
    %1598 = vmatpush.bf16.msra.mxu0 %v1003
    %1599 = vmatmul.bf16.gmra.mxu0 %v37
    %v1600 = vpop.f32.mrf.mxu0
    %v1601 = vadd.f32 %v1588, %v1600
    %v1602 = vpop.f32.mrf.mxu0
    %1603 = vdwg.mxu0
    %1604 = vmatpush.bf16.msra.mxu0 0
    %1605 = vmatpush.bf16.msra.mxu0 0
    %1606 = vmatpush.bf16.msra.mxu0 0
    %1607 = vmatpush.bf16.msra.mxu0 0
    %1608 = vmatpush.bf16.msra.mxu0 0
    %1609 = vmatpush.bf16.msra.mxu0 0
    %1610 = vmatpush.bf16.msra.mxu0 %v1039
    %1611 = vmatpush.bf16.msra.mxu0 %v1035
    %1612 = vmatmul.bf16.gmra.mxu0 %v1251
    %v1613 = vpop.f32.mrf.mxu0
    %v1614 = vadd.f32 %v1601, %v1613
    %v1615 = vpop.f32.mrf.mxu0
    %1616 = vdwg.mxu0
    %v1617 = vmax.f32 %v1341, 0.0
    %v1618 = vmax.f32 %v1432, 0.0
    %v1619 = vmax.f32 %v1523, 0.0
    %v1620 = vmax.f32 %v1614, 0.0
    %v1621 = vadd.f32 %v1617, 3.0
    %v1622 = vadd.f32 %v1618, 3.0
    %v1623 = vadd.f32 %v1619, 3.0
    %v1624 = vadd.f32 %v1620, 3.0
    %v1629 = vrot.slane %v1622, 7
    %v1630 = vrot.slane %v1623, 6
    %v1631 = vrot.slane %v1624, 5
    %vm1632 = vcmask 1040384
    %v1633 = vsel %vm1632, %v1621, %v1629
    %vm1634 = vcmask 1042434
    %v1635 = vsel %vm1634, %v1630, %v1631
    %vm1636 = vcmask 1041408
    %v1637 = vsel %vm1636, %v1633, %v1635
    %v1639 = vlaneseq
    %vm1640 = vcmp.ge.s32.totalorder %v1639, 0
    %vm1641 = vcmp.lt.s32.totalorder %v1639, 400
    %vm1642 = vmand %vm1640, %vm1641
    %1643 = vst.msk [vmem:[#allocation2] sm:$0xf] %vm1642, %v1637
    // Predicated region
    $region14: #{model_forward.1} parent=1 // pred_check
      _
    $region15: #{model_forward.1} parent=1 // pred_check_branch
      %1645 = sbr.rel (0) target = $region17
    $region16: #{model_forward.1} parent=1 // pred_region
      %1647 = vsyncadd [#allocation3], 0
      %s1649 = sshll.u32 [#allocation2], 4
      %s1650 = int_to_ptr.vmem [resolvable:$true] %s1649
      %s1651 = sshll.u32 %s3, 4
      %s1652 = int_to_ptr.hbm [resolvable:$true] %s1651
      %1654 = dma.vmem_to_hbm [thread:$0]  %s1650, 64, %s1652, [#allocation3]
    $region17: #{model_forward.1} parent=1 // pred_fallthru
      _
    // Predicated region
    $region18: #{model_forward.1} parent=1 // pred_check
      _
    $region19: #{model_forward.1} parent=1 // pred_check_branch
      %1656 = sbr.rel (0) target = $region21
    $region20: #{model_forward.1} parent=1 // pred_region
      %1658 = dma.done [#allocation3], 64
    $region21: #{model_forward.1} parent=1 // pred_fallthru
      _
    %1659 = vsyncpa [#allocation3], 1

</llo_original>
